<compile_context>
chip_gen: v6e
topology: v6e:2x2x1
jax: 0.10.0
libtpu: 0.0.40
codegen_flags: <defaults>
</compile_context>

<pallas_src>
import functools

import jax
import jax.numpy as jnp
from jax.experimental import pallas as pl
from jax.experimental.pallas import tpu as pltpu

_BN_EPS = 1e-5
_SLAB_BYTES = 4 * 1024 * 1024   # VMEM budget for the per-step im2col slab
_PREBUILT_MAX_CIN = 64          # layers with Cin <= this use wrapper-side im2col


def _round_up(x, m):
    return ((x + m - 1) // m) * m


def _choose_tile(m):
    """Output-row tile: multiple of 16, <= 512, >= 2 tiles once M > 256."""
    if m <= 256:
        return _round_up(m, 16)
    return min(512, _round_up(-(-m // 2), 16))


# ----------------------------------------------------------------------------
# Pallas kernel: grouped im2col matmul(s) with fused shift (+ReLU) epilogue.
# ----------------------------------------------------------------------------
def _conv_kernel(x_ref, w_ref, shift_ref, o_ref, *scratch,
                 groups, cin, tile_m, relu, x_block_tiled):
    # x_ref:     (tile_m, Kg) bf16 if x_block_tiled (prebuilt im2col), else
    #            (Mext, Cinp) bf16 (padded+flattened+row-extended volume).
    # w_ref:     (NG, Kg, Coutp) bf16, BN scale folded, Cin/Cout zero-padded.
    # shift_ref: (1, Coutp) f32
    # o_ref:     (tile_m, Coutp) bf16/f32
    # scratch:   [slab (tile_m, Kg) bf16]  if any group has >1 tap
    #            [acc  (tile_m, Coutp) f32] if more than one group
    num_groups = len(groups)
    idx = 0
    slab_ref = None
    acc_ref = None
    if any(len(g) > 1 for g in groups):
        slab_ref = scratch[idx]
        idx += 1
    if num_groups > 1:
        acc_ref = scratch[idx]
        idx += 1

    row0 = 0 if x_block_tiled else pl.program_id(1) * tile_m

    for g, offs in enumerate(groups):
        if x_block_tiled:
            lhs = x_ref[...]
        elif len(offs) == 1:
            lhs = x_ref[pl.ds(row0 + offs[0], tile_m), :]
        else:
            # Stage G contiguous row-slices into the lane-aligned im2col slab.
            for j, off in enumerate(offs):
                slab_ref[:, j * cin:(j + 1) * cin] = (
                    x_ref[pl.ds(row0 + off, tile_m), :])
            lhs = slab_ref[...]

        contrib = jnp.dot(lhs, w_ref[g], preferred_element_type=jnp.float32)

        if num_groups > 1:
            if g == 0:
                acc_ref[...] = contrib
                continue
            if g < num_groups - 1:
                acc_ref[...] += contrib
                continue
            contrib = acc_ref[...] + contrib

        result = contrib + shift_ref[...]
        if relu:
            result = jnp.maximum(result, 0.0)
        o_ref[...] = result.astype(o_ref.dtype)


def conv3d_fused(x, layer, *, relu, out_dtype=jnp.bfloat16):
    """3D conv, stride 1, padding (K-1)//2, fused per-channel shift (+ReLU).

    x: (B, D, H, W, Cin); layer holds scale-folded weights (K^3, Cin, Cout)
    f32 and the f32 shift.  Returns (B, D, H, W, Cout) in out_dtype.
    """
    w27 = layer["w27"]
    shift = layer["shift"]
    cout = layer["cout"]
    K = layer["ksize"]
    taps = K * K * K
    B, D, H, W, Cin = x.shape
    pad = (K - 1) // 2
    coutp = _round_up(cout, 128)
    shiftp = jnp.pad(shift, (0, coutp - cout)).reshape(1, coutp).astype(jnp.float32)

    x = x.astype(jnp.bfloat16)
    prebuilt = Cin <= _PREBUILT_MAX_CIN

    if prebuilt:
        # Wrapper-side im2col (cheap at these channel counts): the kernel is a
        # single deep matmul with contraction K = 27*Cin per output tile.
        M = D * H * W
        tile_m = _choose_tile(M)
        num_tiles = -(-M // tile_m)
        m_pad = num_tiles * tile_m
        kg = taps * Cin
        xp = jnp.pad(x, ((0, 0), (pad, pad), (pad, pad), (pad, pad), (0, 0)))
        parts = [xp[:, kd:kd + D, kh:kh + H, kw:kw + W, :]
                 for kd in range(K) for kh in range(K) for kw in range(K)]
        x_in = jnp.concatenate(parts, axis=-1).reshape(B, M, kg)
        x_in = jnp.pad(x_in, ((0, 0), (0, m_pad - M), (0, 0)))
        wg = jnp.pad(w27.reshape(kg, cout), ((0, 0), (0, coutp - cout)))
        wg = wg.reshape(1, kg, coutp).astype(jnp.bfloat16)
        groups = ((0,),)
        cin_k = kg
        x_block_tiled = True
        in_specs = [
            pl.BlockSpec((None, tile_m, kg), lambda b, t: (b, t, 0)),
            pl.BlockSpec((1, kg, coutp), lambda b, t: (0, 0, 0)),
            pl.BlockSpec((1, coutp), lambda b, t: (0, 0)),
        ]
    else:
        # In-kernel VMEM im2col: every tap is a contiguous row-slice of the
        # row-extended flat volume; groups of G taps are copied (lane-aligned,
        # Cin padded to 128) into a VMEM slab and contracted in one matmul.
        cinp = _round_up(Cin, 128)
        Dp, Hp, Wp = D + 2 * pad, H + 2 * pad, W + 2 * pad
        Mp = Dp * Hp * Wp
        tile_m = _choose_tile(Mp)
        num_tiles = -(-Mp // tile_m)
        m_pad = num_tiles * tile_m
        E = pad * (Hp * Wp + Wp + 1)            # max |flat tap offset|
        mext = m_pad + 2 * E
        xp = jnp.pad(x, ((0, 0), (pad, pad), (pad, pad), (pad, pad),
                         (0, cinp - Cin)))
        x_in = jnp.pad(xp.reshape(B, Mp, cinp),
                       ((0, 0), (E, mext - Mp - E), (0, 0)))
        # Largest tap-group whose slab fits the VMEM budget.
        G = 1
        for d in sorted((d for d in range(1, taps + 1) if taps % d == 0),
                        reverse=True):
            if tile_m * d * cinp * 2 <= _SLAB_BYTES:
                G = d
                break
        NG = taps // G
        kg = G * cinp
        wg = jnp.pad(w27, ((0, 0), (0, cinp - Cin), (0, coutp - cout)))
        wg = wg.reshape(NG, kg, coutp).astype(jnp.bfloat16)
        rel = [(kd - pad) * Hp * Wp + (kh - pad) * Wp + (kw - pad)
               for kd in range(K) for kh in range(K) for kw in range(K)]
        groups = tuple(tuple(E + r for r in rel[g * G:(g + 1) * G])
                       for g in range(NG))
        cin_k = cinp
        x_block_tiled = False
        in_specs = [
            pl.BlockSpec((None, mext, cinp), lambda b, t: (b, 0, 0)),
            pl.BlockSpec((NG, kg, coutp), lambda b, t: (0, 0, 0)),
            pl.BlockSpec((1, coutp), lambda b, t: (0, 0)),
        ]

    scratch_shapes = []
    if any(len(g) > 1 for g in groups):
        scratch_shapes.append(pltpu.VMEM((tile_m, kg), jnp.bfloat16))
    if len(groups) > 1:
        scratch_shapes.append(pltpu.VMEM((tile_m, coutp), jnp.float32))

    flops = 2 * B * D * H * W * taps * Cin * cout
    bytes_accessed = (x_in.size * 2 + wg.size * 2 + shiftp.size * 4
                      + B * m_pad * coutp * jnp.dtype(out_dtype).itemsize)

    out = pl.pallas_call(
        functools.partial(_conv_kernel, groups=groups, cin=cin_k,
                          tile_m=tile_m, relu=relu, x_block_tiled=x_block_tiled),
        out_shape=jax.ShapeDtypeStruct((B, m_pad, coutp), out_dtype),
        grid=(B, num_tiles),
        in_specs=in_specs,
        out_specs=pl.BlockSpec((None, tile_m, coutp), lambda b, t: (b, t, 0)),
        scratch_shapes=scratch_shapes,
        compiler_params=pltpu.CompilerParams(
            dimension_semantics=("parallel", "parallel")),
        cost_estimate=pl.CostEstimate(flops=flops, transcendentals=0,
                                      bytes_accessed=bytes_accessed),
    )(x_in, wg, shiftp)

    if prebuilt:
        return out[:, :D * H * W].reshape(B, D, H, W, coutp)[..., :cout]
    o = out[:, :Dp * Hp * Wp].reshape(B, Dp, Hp, Wp, coutp)
    # Drop padded-border rows (garbage) and zero-padded output channels.
    return o[:, pad:pad + D, pad:pad + H, pad:pad + W, :cout]


def conv3d_reference(x, layer, *, relu):
    """Plain-JAX reference for conv3d_fused (used only for a self-check)."""
    w = layer["w27"].astype(jnp.bfloat16).astype(jnp.float32)
    shift = layer["shift"]
    K = layer["ksize"]
    B, D, H, W, Cin = x.shape
    pad = (K - 1) // 2
    xq = x.astype(jnp.bfloat16).astype(jnp.float32)
    xp = jnp.pad(xq, ((0, 0), (pad, pad), (pad, pad), (pad, pad), (0, 0)))
    acc = jnp.zeros((B, D, H, W, layer["cout"]), jnp.float32)
    k = 0
    for kd in range(K):
        for kh in range(K):
            for kw in range(K):
                acc = acc + jnp.einsum(
                    "bdhwc,co->bdhwo",
                    xp[:, kd:kd + D, kh:kh + H, kw:kw + W, :], w[k])
                k += 1
    acc = acc + shift.reshape(1, 1, 1, 1, -1)
    if relu:
        acc = jnp.maximum(acc, 0.0)
    return acc


# ----------------------------------------------------------------------------
# Glue ops (plain JAX): max-pool and trilinear interpolation.
# ----------------------------------------------------------------------------
def max_pool3d(x, ksize):
    """F.max_pool3d with stride == kernel_size, no padding.  x: (B,D,H,W,C)."""
    kd, kh, kw = ksize
    B, D, H, W, C = x.shape
    xr = x.reshape(B, D // kd, kd, H // kh, kh, W // kw, kw, C)
    return xr.max(axis=(2, 4, 6))


def _lin_idx(in_size, out_size):
    out = jnp.arange(out_size, dtype=jnp.float32)
    src = (out + 0.5) * (in_size / out_size) - 0.5
    src = jnp.maximum(src, 0.0)                 # PyTorch align_corners=False
    lo = jnp.minimum(jnp.floor(src).astype(jnp.int32), in_size - 1)
    hi = jnp.minimum(lo + 1, in_size - 1)
    w = src - lo.astype(jnp.float32)
    return lo, hi, w


def trilinear_resize(x, out_size):
    """F.interpolate(mode='trilinear', align_corners=False).  x: (B,D,H,W,C)."""
    B, D, H, W, C = x.shape
    Do, Ho, Wo = out_size
    d0, d1, wd = _lin_idx(D, Do)
    h0, h1, wh = _lin_idx(H, Ho)
    w0, w1, ww = _lin_idx(W, Wo)

    xd = (jnp.take(x, d0, axis=1) * (1.0 - wd)[None, :, None, None, None]
          + jnp.take(x, d1, axis=1) * wd[None, :, None, None, None])
    xh = (jnp.take(xd, h0, axis=2) * (1.0 - wh)[None, None, :, None, None]
          + jnp.take(xd, h1, axis=2) * wh[None, None, :, None, None])
    xw = (jnp.take(xh, w0, axis=3) * (1.0 - ww)[None, None, None, :, None]
          + jnp.take(xh, w1, axis=3) * ww[None, None, None, :, None])
    return xw


# ----------------------------------------------------------------------------
# Parameter construction (deterministic, synthetic).
# ----------------------------------------------------------------------------
def make_layer(key, cin, cout_fields, repr_size, ksize, *, bn):
    """cout = cout_fields * repr_size channels (escnn field structure).

    Returns BN/bias-scale-folded weights (K^3, Cin, Cout) f32, the f32 shift
    vector (Cout,), and layer metadata."""
    cout = cout_fields * repr_size
    kw_, kb_, kg_, kbt_, km_, kv_ = jax.random.split(key, 6)
    fan_in = cin * ksize ** 3
    w = jax.random.normal(kw_, (ksize, ksize, ksize, cin, cout),
                          jnp.float32) / jnp.sqrt(fan_in)
    bias_f = 0.05 * jax.random.normal(kb_, (cout_fields,), jnp.float32)
    if bn:
        gamma_f = 1.0 + 0.05 * jax.random.normal(kg_, (cout_fields,), jnp.float32)
        beta_f = 0.05 * jax.random.normal(kbt_, (cout_fields,), jnp.float32)
        mean_f = 0.05 * jax.random.normal(km_, (cout_fields,), jnp.float32)
        var_f = 0.5 + 0.5 * jax.random.uniform(kv_, (cout_fields,), jnp.float32)
        inv = gamma_f / jnp.sqrt(var_f + _BN_EPS)
        scale_f = inv
        shift_f = beta_f + inv * (bias_f - mean_f)
    else:
        scale_f = jnp.ones((cout_fields,), jnp.float32)
        shift_f = bias_f
    # escnn shares BN/bias parameters across the repr_size components of a field.
    scale = jnp.repeat(scale_f, repr_size)
    shift = jnp.repeat(shift_f, repr_size)

    w = w * scale[None, None, None, None, :]
    w27 = w.reshape(ksize ** 3, cin, cout)
    return {"w27": w27, "shift": shift.astype(jnp.float32),
            "cout": cout, "ksize": ksize}


def init_params(key, input_frames, output_frames, ksize, N, width, grid_dim):
    ks = jax.random.split(key, 11)
    cin0 = input_frames + grid_dim
    p = {}
    p["conv1"]        = make_layer(ks[0], cin0,                width,      N, ksize, bn=True)
    p["conv2"]        = make_layer(ks[1], width * N,           2 * width,  N, ksize, bn=True)
    p["conv2_1"]      = make_layer(ks[2], 2 * width * N,       2 * width,  N, ksize, bn=True)
    p["conv3"]        = make_layer(ks[3], 2 * width * N,       4 * width,  N, ksize, bn=True)
    p["conv3_1"]      = make_layer(ks[4], 4 * width * N,       4 * width,  N, ksize, bn=True)
    p["conv4"]        = make_layer(ks[5], 4 * width * N,       8 * width,  N, ksize, bn=True)
    p["conv4_1"]      = make_layer(ks[6], 8 * width * N,       8 * width,  N, ksize, bn=True)
    p["deconv3"]      = make_layer(ks[7], 8 * width * N,       2 * width,  N, ksize, bn=True)
    p["deconv2"]      = make_layer(ks[8], 6 * width * N,       width,      N, ksize, bn=True)
    p["deconv1"]      = make_layer(ks[9], 3 * width * N,       width // 2, 1, ksize, bn=False)
    p["output_layer"] = make_layer(ks[10], width // 2 + cin0,  output_frames, 1, ksize, bn=False)
    return p


# ----------------------------------------------------------------------------
# Full Unet_Rot_3D forward (grid_type="None" -> grid adds no channels).
# ----------------------------------------------------------------------------
def unet_rot_3d_forward(x, params):
    # x: (B, X, Y, Z, T_in, 1) — same call convention as the PyTorch module.
    x = x.reshape(*x.shape[:-2], -1)                  # (B, X, Y, Z, T_in)
    # torch: x.permute(0,4,3,1,2) -> NCDHW (B, C, Z, X, Y); channels-last here:
    xg = jnp.transpose(x, (0, 3, 1, 2, 4)).astype(jnp.bfloat16)   # (B, Z, X, Y, C)

    x_pool = max_pool3d(xg, (1, 2, 2))
    out_conv1 = conv3d_fused(x_pool, params["conv1"], relu=True)
    out_conv2 = conv3d_fused(conv3d_fused(out_conv1, params["conv2"], relu=True),
                             params["conv2_1"], relu=True)

    # depth here is 8, so pool_padding = (0, 0, 0)
    out_conv3 = conv3d_fused(conv3d_fused(max_pool3d(out_conv2, (2, 2, 2)),
                                          params["conv3"], relu=True),
                             params["conv3_1"], relu=True)
    out_conv4 = conv3d_fused(conv3d_fused(max_pool3d(out_conv3, (2, 2, 2)),
                                          params["conv4"], relu=True),
                             params["conv4_1"], relu=True)

    _, D4, H4, W4, _ = out_conv4.shape
    out_deconv3 = conv3d_fused(trilinear_resize(out_conv4, (2 * D4, 2 * H4, 2 * W4)),
                               params["deconv3"], relu=True)
    concat3 = jnp.concatenate([out_conv3, out_deconv3], axis=-1)

    _, D3, H3, W3, _ = concat3.shape
    out_deconv2 = conv3d_fused(trilinear_resize(concat3, (2 * D3, 2 * H3, 2 * W3)),
                               params["deconv2"], relu=True)
    concat2 = jnp.concatenate([out_conv2, out_deconv2], axis=-1)

    _, D2, H2, W2, _ = concat2.shape
    out_deconv1 = conv3d_fused(trilinear_resize(concat2, (D2, 2 * H2, 2 * W2)),
                               params["deconv1"], relu=False)
    concat0 = jnp.concatenate([xg, out_deconv1], axis=-1)

    out = conv3d_fused(concat0, params["output_layer"], relu=False,
                       out_dtype=jnp.float32)          # (B, Z, X, Y, C)
    # torch: out.permute(0,3,4,2,1): (B, C, Z, X, Y) -> (B, X, Y, Z, C)
    return jnp.transpose(out, (0, 2, 3, 1, 4))


if __name__ == "__main__":
    # --- self-checks of the fused conv kernel against a plain-JAX reference ---
    checks = [
        # (Cin, cout_fields, repr, spatial, relu):
        (16, 6, 4, (4, 5, 6), True),    # prebuilt wrapper-im2col path
        (128, 6, 4, (4, 4, 4), True),   # staged path, single group (G=27)
        (200, 6, 4, (8, 8, 8), False),  # staged path, Cin padding + 3 groups
    ]
    for i, (cin, cf, rs, (dd, hh, ww_), relu) in enumerate(checks):
        kl, kx = jax.random.split(jax.random.PRNGKey(100 + i))
        chk_layer = make_layer(kl, cin, cf, rs, 3, bn=True)
        x_chk = jax.random.normal(kx, (2, dd, hh, ww_, cin), jnp.float32)
        got = jax.jit(lambda a: conv3d_fused(a, chk_layer, relu=relu))(x_chk)
        want = conv3d_reference(x_chk, chk_layer, relu=relu)
        assert got.shape == want.shape, (i, got.shape, want.shape)
        gotf = got.astype(jnp.float32)
        assert bool(jnp.allclose(gotf, want, atol=5e-2, rtol=5e-2)), (
            i, float(jnp.max(jnp.abs(gotf - want))))

    # --- full forward pass ---
    key = jax.random.PRNGKey(0)
    B, X, Y, Z = 2, 16, 16, 8
    input_frames, output_frames = 4, 4
    width, N, ksize = 8, 4, 3
    grid_dim = 0  # grid_type = "None"

    k_p, k_x = jax.random.split(key)
    params = init_params(k_p, input_frames, output_frames, ksize, N, width, grid_dim)
    x = jax.random.normal(k_x, (B, X, Y, Z, input_frames, 1), jnp.float32)

    fwd = jax.jit(lambda inp: unet_rot_3d_forward(inp, params))
    out = fwd(x)
    jax.block_until_ready(out)

    assert out.shape == (B, X, Y, Z, output_frames), out.shape
    assert bool(jnp.all(jnp.isfinite(out)))
    print("KERNEL_OK")
</pallas_src>

<mosaic_0001>
module attributes {stable_mosaic.version = 11 : i64} {
  func.func @_conv_kernel(%arg0: i32, %arg1: i32, %arg2: memref<1x128x432xbf16, #tpu.memory_space<vmem>>, %arg3: memref<1x432x128xbf16, #tpu.memory_space<vmem>>, %arg4: memref<1x128xf32, #tpu.memory_space<vmem>>, %arg5: memref<1x128x128xbf16, #tpu.memory_space<vmem>>) attributes {dimension_semantics = [#tpu.dimension_semantics<parallel>, #tpu.dimension_semantics<parallel>], iteration_bounds = array<i64: 2, 1>, scalar_prefetch = 0 : i64, scratch_operands = 0 : i64, tpu.core_type = #tpu.core_type<tc>, window_params = [{transform_indices = @transform_0, window_bounds = array<i64: 1, 128, 432>}, {pipeline_mode = #tpu.pipeline_mode<synchronous>, transform_indices = @transform_1, window_bounds = array<i64: 1, 432, 128>}, {pipeline_mode = #tpu.pipeline_mode<synchronous>, transform_indices = @transform_2, window_bounds = array<i64: 1, 128>}, {transform_indices = @transform_3, window_bounds = array<i64: 1, 128, 128>}]} {
    %c0 = arith.constant 0 : index
    %c0_0 = arith.constant 0 : index
    %c0_1 = arith.constant 0 : index
    %0 = vector.load %arg2[%c0, %c0_0, %c0_1] : memref<1x128x432xbf16, #tpu.memory_space<vmem>>, vector<1x128x432xbf16>
    %1 = vector.shape_cast %0 : vector<1x128x432xbf16> to vector<128x432xbf16>
    %c0_2 = arith.constant 0 : index
    %c0_3 = arith.constant 0 : index
    %c0_4 = arith.constant 0 : index
    %2 = vector.load %arg3[%c0_2, %c0_3, %c0_4] : memref<1x432x128xbf16, #tpu.memory_space<vmem>>, vector<1x432x128xbf16>
    %3 = vector.shape_cast %2 : vector<1x432x128xbf16> to vector<432x128xbf16>
    %cst = arith.constant dense<0.000000e+00> : vector<128x128xf32>
    %4 = tpu.matmul %1, %3, %cst {dimension_numbers = #tpu.dot_dimension_numbers<[1], [0], [0], [1], [0, 0, 1, 1], [], []>} : vector<128x432xbf16>, vector<432x128xbf16>, vector<128x128xf32> -> vector<128x128xf32>
    %c0_5 = arith.constant 0 : index
    %c0_6 = arith.constant 0 : index
    %5 = vector.load %arg4[%c0_5, %c0_6] : memref<1x128xf32, #tpu.memory_space<vmem>>, vector<1x128xf32>
    %6 = vector.broadcast %5 : vector<1x128xf32> to vector<128x128xf32>
    %7 = arith.addf %4, %6 : vector<128x128xf32>
    %cst_7 = arith.constant 0.000000e+00 : f32
    %8 = vector.broadcast %cst_7 : f32 to vector<128x128xf32>
    %9 = arith.maximumf %7, %8 : vector<128x128xf32>
    %10 = arith.truncf %9 : vector<128x128xf32> to vector<128x128xbf16>
    %c0_8 = arith.constant 0 : index
    %c0_9 = arith.constant 0 : index
    %c0_10 = arith.constant 0 : index
    %11 = vector.load %arg5[%c0_8, %c0_9, %c0_10] : memref<1x128x128xbf16, #tpu.memory_space<vmem>>, vector<1x128x128xbf16>
    %12 = vector.shape_cast %11 : vector<1x128x128xbf16> to vector<128x128xbf16>
    %13 = vector.shape_cast %10 : vector<128x128xbf16> to vector<1x128x128xbf16>
    tpu.vector_store %arg5[%c0_8, %c0_9, %c0_10], %13 {strides = array<i32>} : memref<1x128x128xbf16, #tpu.memory_space<vmem>>, vector<1x128x128xbf16>,
    return
  }
  func.func @transform_0(%arg0: i32, %arg1: i32) -> (i32, i32, i32) {
    %c0_i32 = arith.constant 0 : i32
    %c0_i32_0 = arith.constant 0 : i32
    return %arg0, %arg1, %c0_i32 : i32, i32, i32
  }
  func.func @transform_1(%arg0: i32, %arg1: i32) -> (i32, i32, i32) {
    %c0_i32 = arith.constant 0 : i32
    %c0_i32_0 = arith.constant 0 : i32
    %c0_i32_1 = arith.constant 0 : i32
    %c0_i32_2 = arith.constant 0 : i32
    return %c0_i32, %c0_i32_0, %c0_i32_1 : i32, i32, i32
  }
  func.func @transform_2(%arg0: i32, %arg1: i32) -> (i32, i32) {
    %c0_i32 = arith.constant 0 : i32
    %c0_i32_0 = arith.constant 0 : i32
    %c0_i32_1 = arith.constant 0 : i32
    return %c0_i32, %c0_i32_0 : i32, i32
  }
  func.func @transform_3(%arg0: i32, %arg1: i32) -> (i32, i32, i32) {
    %c0_i32 = arith.constant 0 : i32
    %c0_i32_0 = arith.constant 0 : i32
    return %arg0, %arg1, %c0_i32 : i32, i32, i32
  }
}

</mosaic_0001>

<llo_original>
// kernel: _lambda_.1
$region0: #{_lambda_.1}
  #allocation0 [shape = 'u32[]', space=smem, size = 0x4, offset = 0x4, fixed_abs, tag = 'smem constant byte address 0x4 - core index']
  #allocation1 [shape = 'u32[144,128]{1,0:T(1,128)}', space=vmem, size = 0x12000, scoped, tag = 'internal scratch']
  %s0 = inlined_call_operand.vmem [shape: bf16[2,128,432], index: 0, kind: input, shape index: {}]
  %s1 = inlined_call_operand.vmem [shape: bf16[1,432,128], index: 1, kind: input, shape index: {}]
  %s2 = inlined_call_operand.vmem [shape: f32[1,128], index: 2, kind: input, shape index: {}]
  %s3 = inlined_call_operand.vmem [shape: bf16[2,128,128], index: 3, kind: output, shape index: {}]
  %s4 = sld [smem:[#allocation0]]
  $region45: #{_lambda_.1} parent=0
    _
  %s6 = ssub.s32 1, %s4
  %s7 = scalar_select 0, %s6, %s4
  loop: start=0, step=1, limit=4
  $region2: #{_lambda_.1} parent=0 // loop_pre_header
    _
  $region3: #{_lambda_.1} parent=0 // loop_header
    %s9 = sphi 0, %s13
    %p10 = scmp.ge.s32.totalorder %s9, 4
    %s16 = sphi 0, %s28
    %s17 = sphi 0, %s24
    %s18 = sphi 0, %s16
    %s19 = sphi 0, %s17
    %s20 = sphi 0, %s18
    %s21 = sphi 0, %s19
    %s33 = sphi 0, %s35
    %s36 = sphi 0, %s33
    %s37 = sphi 0, %s36
    %s53 = sphi 0, %s37
    %s57 = sphi 0, %s57
    %s59 = sphi 0, %s57
    %s60 = sphi 0, %s59
    %s74 = sphi 0, %s60
    %s78 = sphi 0, %s78
    %s80 = sphi 0, %s78
    %s81 = sphi 0, %s80
    %s95 = sphi 0, %s81
    %s103 = sphi 0, %s105
    %s106 = sphi 0, %s103
    %s107 = sphi 0, %s106
    %s123 = sphi 0, %s107
  $region4: #{_lambda_.1} parent=0 // loop_header_branch
    %12 = sbr.rel (%p10) target = $region8
  $region5: #{_lambda_.1} parent=0 // loop_body
    %s14 = ssub.s32 %s9, 1
    %s15 = ssub.s32 %s9, 2
    %s22 = sadd.s32 1, %s17
    %p23 = scmp.ge.s32.totalorder %s22, 1
    %s24 = scalar_select %p23, 0, %s22
    %s25 = sadd.s32 1, %s16
    %s26 = scalar_select %p23, %s25, %s16
    %p27 = scmp.ge.s32.totalorder %s26, 2
    %s28 = scalar_select %p27, 0, %s26
    %s29 = ssub.s32 %s16, %s28
    %s30 = ssub.s32 %s17, %s24
    %s31 = sor.u32 %s29, %s30
    %p32 = scmp.eq.s32.totalorder %s31, 0
    %s34 = sadd.s32 %s33, 1
    %s35 = scalar_select %p32, %s33, %s34
    %p38 = pneg %p32
    %p39 = scmp.eq.s32.totalorder %s9, 1
    %p40 = por %p38, %p39
    %p41 = scmp.ne.s32.totalorder %s33, %s36
    %p42 = scmp.eq.s32.totalorder %s9, 0
    %p43 = por %p41, %p42
    %p44 = scmp.ne.s32.totalorder %s33, %s36
    %p45 = scmp.eq.s32.totalorder %s14, 1
    %p46 = por %p44, %p45
    %p47 = scmp.ne.s32.totalorder %s36, %s37
    %p48 = scmp.eq.s32.totalorder %s14, 0
    %p49 = por %p47, %p48
    %p50 = scmp.ne.s32.totalorder %s36, %s37
    %p51 = scmp.eq.s32.totalorder %s15, 1
    %p52 = por %p50, %p51
    %p54 = scmp.ne.s32.totalorder %s37, %s53
    %p55 = scmp.eq.s32.totalorder %s15, 0
    %p56 = por %p54, %p55
    %s58 = sadd.s32 %s57, 1
    %p61 = scmp.eq.s32.totalorder %s9, 1
    %p62 = scmp.ne.s32.totalorder %s57, %s59
    %p63 = scmp.eq.s32.totalorder %s9, 0
    %p64 = por %p62, %p63
    %p65 = scmp.ne.s32.totalorder %s57, %s59
    %p66 = scmp.eq.s32.totalorder %s14, 1
    %p67 = por %p65, %p66
    %p68 = scmp.ne.s32.totalorder %s59, %s60
    %p69 = scmp.eq.s32.totalorder %s14, 0
    %p70 = por %p68, %p69
    %p71 = scmp.ne.s32.totalorder %s59, %s60
    %p72 = scmp.eq.s32.totalorder %s15, 1
    %p73 = por %p71, %p72
    %p75 = scmp.ne.s32.totalorder %s60, %s74
    %p76 = scmp.eq.s32.totalorder %s15, 0
    %p77 = por %p75, %p76
    %s79 = sadd.s32 %s78, 1
    %p82 = scmp.eq.s32.totalorder %s9, 1
    %p83 = scmp.ne.s32.totalorder %s78, %s80
    %p84 = scmp.eq.s32.totalorder %s9, 0
    %p85 = por %p83, %p84
    %p86 = scmp.ne.s32.totalorder %s78, %s80
    %p87 = scmp.eq.s32.totalorder %s14, 1
    %p88 = por %p86, %p87
    %p89 = scmp.ne.s32.totalorder %s80, %s81
    %p90 = scmp.eq.s32.totalorder %s14, 0
    %p91 = por %p89, %p90
    %p92 = scmp.ne.s32.totalorder %s80, %s81
    %p93 = scmp.eq.s32.totalorder %s15, 1
    %p94 = por %p92, %p93
    %p96 = scmp.ne.s32.totalorder %s81, %s95
    %p97 = scmp.eq.s32.totalorder %s15, 0
    %p98 = por %p96, %p97
    %s99 = ssub.s32 %s16, %s28
    %s100 = ssub.s32 %s17, %s24
    %s101 = sor.u32 %s99, %s100
    %p102 = scmp.eq.s32.totalorder %s101, 0
    %s104 = sadd.s32 %s103, 1
    %s105 = scalar_select %p102, %s103, %s104
    %p108 = pneg %p102
    %p109 = scmp.eq.s32.totalorder %s9, 1
    %p110 = por %p108, %p109
    %p111 = scmp.ne.s32.totalorder %s103, %s106
    %p112 = scmp.eq.s32.totalorder %s9, 0
    %p113 = por %p111, %p112
    %p114 = scmp.ne.s32.totalorder %s103, %s106
    %p115 = scmp.eq.s32.totalorder %s14, 1
    %p116 = por %p114, %p115
    %p117 = scmp.ne.s32.totalorder %s106, %s107
    %p118 = scmp.eq.s32.totalorder %s14, 0
    %p119 = por %p117, %p118
    %p120 = scmp.ne.s32.totalorder %s106, %s107
    %p121 = scmp.eq.s32.totalorder %s15, 1
    %p122 = por %p120, %p121
    %p124 = scmp.ne.s32.totalorder %s107, %s123
    %p125 = scmp.eq.s32.totalorder %s15, 0
    %p126 = por %p124, %p125
    %p127 = scmp.le.s32.totalorder 1, %s9
    %p128 = scmp.lt.s32.totalorder %s9, 3
    %p129 = pnand %p127, %p128
    %p130 = pneg %p129
    // Predicated region
    $region9: #{_lambda_.1} parent=5 // pred_check
      _
    $region10: #{_lambda_.1} parent=5 // pred_check_branch
      %132 = sbr.rel (%p129) target = $region12
    $region11: #{_lambda_.1} parent=5 // pred_region
      %s133 = ssub.s32 %s9, 1
      // Predicated region
      $region13: #{_lambda_.1} parent=11 // pred_check
        %p134 = pneg %p70
      $region14: #{_lambda_.1} parent=11 // pred_check_branch
        %136 = sbr.rel (%p134) target = $region16
      $region15: #{_lambda_.1} parent=11 // pred_region
        _
      $region16: #{_lambda_.1} parent=11 // pred_fallthru
        _
      // Predicated region
      $region17: #{_lambda_.1} parent=11 // pred_check
        %p137 = pneg %p91
      $region18: #{_lambda_.1} parent=11 // pred_check_branch
        %139 = sbr.rel (%p137) target = $region20
      $region19: #{_lambda_.1} parent=11 // pred_region
        _
      $region20: #{_lambda_.1} parent=11 // pred_fallthru
        _
    $region12: #{_lambda_.1} parent=5 // pred_fallthru
      _
    %p140 = scmp.lt.s32.totalorder %s9, 2
    // Predicated region
    $region21: #{_lambda_.1} parent=5 // pred_check
      %p141 = pneg %p140
    $region22: #{_lambda_.1} parent=5 // pred_check_branch
      %143 = sbr.rel (%p141) target = $region24
    $region23: #{_lambda_.1} parent=5 // pred_region
      // Predicated region
      $region25: #{_lambda_.1} parent=23 // pred_check
        %p144 = pneg %p43
      $region26: #{_lambda_.1} parent=23 // pred_check_branch
        %146 = sbr.rel (%p144) target = $region28
      $region27: #{_lambda_.1} parent=23 // pred_region
        %s147 = smul.u32 16, %s17
        %p148 = scmp.lt.s32.totalorder %s16, 1
        %s149 = scalar_select %p148, %s16, 1
        %p150 = scmp.lt.s32.totalorder %s147, 15
        %s151 = scalar_select %p150, %s147, 15
        %s152 = smul.addr %s151, 4
        %s153 = smul.addr %s149, 64
        %s154 = sadd.s32 %s152, %s153
        %s155 = smul.addr %s154, 4
        %s156 = scalar_lea.vmem %s0, %s155
        %s157 = smul.u32 16, %s17
      $region28: #{_lambda_.1} parent=23 // pred_fallthru
        _
    $region24: #{_lambda_.1} parent=5 // pred_fallthru
      _
    %p158 = scmp.le.s32.totalorder 1, %s9
    %p159 = scmp.lt.s32.totalorder %s9, 3
    %p160 = pnand %p158, %p159
    %p161 = pneg %p160
    // Predicated region
    $region29: #{_lambda_.1} parent=5 // pred_check
      _
    $region30: #{_lambda_.1} parent=5 // pred_check_branch
      %163 = sbr.rel (%p160) target = $region32
    $region31: #{_lambda_.1} parent=5 // pred_region
      %s164 = ssub.s32 %s9, 1
      %s165 = smul.u32 16, %s19
      %p166 = scmp.lt.s32.totalorder %s18, 1
      %s167 = scalar_select %p166, %s18, 1
      %p168 = scmp.lt.s32.totalorder %s165, 15
      %s169 = scalar_select %p168, %s165, 15
      %s170 = smul.addr %s169, 4
      %s171 = smul.addr %s167, 64
      %s172 = sadd.s32 %s170, %s171
      %s173 = smul.addr %s172, 4
      %s174 = scalar_lea.vmem %s0, %s173
      %p175 = pneg %p49
      %p176 = pneg %p46
      %p177 = pneg %p70
      %p178 = pneg %p67
      %p179 = pneg %p91
      %p180 = pneg %p88
      %p181 = pneg %p119
      %p182 = pneg %p116
      %s183 = smul.u32 16, %s19
      %p184 = scmp.lt.s32.totalorder %s18, 1
      %s185 = scalar_select %p184, %s18, 1
      %p186 = scmp.lt.s32.totalorder %s183, 15
      %s187 = scalar_select %p186, %s183, 15
      %s188 = smul.addr %s185, 16
      %s189 = sadd.s32 %s187, %s188
      %s190 = smul.addr %s189, 4
      %s191 = scalar_lea.vmem %s3, %s190
      %s192 = smul.u32 16, %s19
      %p193 = scmp.lt.s32.totalorder %s18, 1
      %s194 = scalar_select %p193, %s18, 1
      %p195 = scmp.lt.s32.totalorder %s192, 15
      %s196 = scalar_select %p195, %s192, 15
      %s197 = smul.addr %s196, 4
      %s198 = smul.addr %s194, 64
      %s199 = sadd.s32 %s197, %s198
      %s200 = smul.addr %s199, 4
      %s201 = scalar_lea.vmem %s0, %s200
      %s202 = smul.u32 16, %s19
      %s203 = smul.u32 16, %s19
      %p204 = scmp.lt.s32.totalorder %s18, 1
      %s205 = scalar_select %p204, %s18, 1
      %p206 = scmp.lt.s32.totalorder %s203, 15
      %s207 = scalar_select %p206, %s203, 15
      %s208 = smul.addr %s205, 16
      %s209 = sadd.s32 %s207, %s208
      %s210 = smul.addr %s209, 4
      %s211 = scalar_lea.vmem %s3, %s210
      %s212 = smul.u32 16, %s19
      %v214 = vld [vmem:[%s201] sm:$0xff]
      %v215 = vld [vmem:[%s201 + $0x8] sm:$0xff]
      %v216 = vld [vmem:[%s201 + $0x10] sm:$0xff]
      %v217 = vld [vmem:[%s201 + $0x18] sm:$0xff]
      %v218 = vld [vmem:[%s201 + $0x20] sm:$0xff]
      %v219 = vld [vmem:[%s201 + $0x28] sm:$0xff]
      %v220 = vld [vmem:[%s201 + $0x30] sm:$0xff]
      %v221 = vld [vmem:[%s201 + $0x38] sm:$0xff]
      %v222 = vld [vmem:[%s201 + $0x40] sm:$0xff]
      %v223 = vld [vmem:[%s201 + $0x48] sm:$0xff]
      %v224 = vld [vmem:[%s201 + $0x50] sm:$0xff]
      %v225 = vld [vmem:[%s201 + $0x58] sm:$0xff]
      %v226 = vld [vmem:[%s201 + $0x60] sm:$0xff]
      %v227 = vld [vmem:[%s201 + $0x68] sm:$0xff]
      %v228 = vld [vmem:[%s201 + $0x70] sm:$0xff]
      %v229 = vld [vmem:[%s201 + $0x78] sm:$0xff]
      %v230 = vld [vmem:[%s201 + $0x80] sm:$0xff]
      %v231 = vld [vmem:[%s201 + $0x88] sm:$0xff]
      %v232 = vld [vmem:[%s201 + $0x90] sm:$0xff]
      %v233 = vld [vmem:[%s201 + $0x98] sm:$0xff]
      %v234 = vld [vmem:[%s201 + $0xa0] sm:$0xff]
      %v235 = vld [vmem:[%s201 + $0xa8] sm:$0xff]
      %v236 = vld [vmem:[%s201 + $0xb0] sm:$0xff]
      %v237 = vld [vmem:[%s201 + $0xb8] sm:$0xff]
      %v238 = vld [vmem:[%s201 + $0xc0] sm:$0xff]
      %v239 = vld [vmem:[%s201 + $0xc8] sm:$0xff]
      %v240 = vld [vmem:[%s201 + $0xd0] sm:$0xff]
      %v241 = vld [vmem:[%s201 + $0xd8] sm:$0xff]
      %v242 = vld [vmem:[%s201 + $0xe0] sm:$0xff]
      %v243 = vld [vmem:[%s201 + $0xe8] sm:$0xff]
      %v244 = vld [vmem:[%s201 + $0xf0] sm:$0xff]
      %v245 = vld [vmem:[%s201 + $0xf8] sm:$0xff]
      %v246 = vld [vmem:[%s1] sm:$0xf]
      %v247 = vld [vmem:[%s1 + $0x4] sm:$0xf]
      %v248 = vld [vmem:[%s1 + $0x8] sm:$0xf]
      %v249 = vld [vmem:[%s1 + $0xc] sm:$0xf]
      %v250 = vld [vmem:[%s1 + $0x10] sm:$0xf]
      %v251 = vld [vmem:[%s1 + $0x14] sm:$0xf]
      %v252 = vld [vmem:[%s1 + $0x18] sm:$0xf]
      %v253 = vld [vmem:[%s1 + $0x1c] sm:$0xf]
      %v254 = vld [vmem:[%s1 + $0x20] sm:$0xf]
      %v255 = vld [vmem:[%s1 + $0x24] sm:$0xf]
      %v256 = vld [vmem:[%s1 + $0x28] sm:$0xf]
      %v257 = vld [vmem:[%s1 + $0x2c] sm:$0xf]
      %v258 = vld [vmem:[%s1 + $0x30] sm:$0xf]
      %v259 = vld [vmem:[%s1 + $0x34] sm:$0xf]
      %v260 = vld [vmem:[%s1 + $0x38] sm:$0xf]
      %v261 = vld [vmem:[%s1 + $0x3c] sm:$0xf]
      %v262 = vld [vmem:[%s1 + $0x40] sm:$0xf]
      %v263 = vld [vmem:[%s1 + $0x44] sm:$0xf]
      %v264 = vld [vmem:[%s1 + $0x48] sm:$0xf]
      %v265 = vld [vmem:[%s1 + $0x4c] sm:$0xf]
      %v266 = vld [vmem:[%s1 + $0x50] sm:$0xf]
      %v267 = vld [vmem:[%s1 + $0x54] sm:$0xf]
      %v268 = vld [vmem:[%s1 + $0x58] sm:$0xf]
      %v269 = vld [vmem:[%s1 + $0x5c] sm:$0xf]
      %v270 = vld [vmem:[%s1 + $0x60] sm:$0xf]
      %v271 = vld [vmem:[%s1 + $0x64] sm:$0xf]
      %v272 = vld [vmem:[%s1 + $0x68] sm:$0xf]
      %v273 = vld [vmem:[%s1 + $0x6c] sm:$0xf]
      %v274 = vld [vmem:[%s1 + $0x70] sm:$0xf]
      %v275 = vld [vmem:[%s1 + $0x74] sm:$0xf]
      %v276 = vld [vmem:[%s1 + $0x78] sm:$0xf]
      %v277 = vld [vmem:[%s1 + $0x7c] sm:$0xf]
      %v278 = vld [vmem:[%s1 + $0x80] sm:$0xf]
      %v279 = vld [vmem:[%s1 + $0x84] sm:$0xf]
      %v280 = vld [vmem:[%s1 + $0x88] sm:$0xf]
      %v281 = vld [vmem:[%s1 + $0x8c] sm:$0xf]
      %v282 = vld [vmem:[%s1 + $0x90] sm:$0xf]
      %v283 = vld [vmem:[%s1 + $0x94] sm:$0xf]
      %v284 = vld [vmem:[%s1 + $0x98] sm:$0xf]
      %v285 = vld [vmem:[%s1 + $0x9c] sm:$0xf]
      %v286 = vld [vmem:[%s1 + $0xa0] sm:$0xf]
      %v287 = vld [vmem:[%s1 + $0xa4] sm:$0xf]
      %v288 = vld [vmem:[%s1 + $0xa8] sm:$0xf]
      %v289 = vld [vmem:[%s1 + $0xac] sm:$0xf]
      %v290 = vld [vmem:[%s1 + $0xb0] sm:$0xf]
      %v291 = vld [vmem:[%s1 + $0xb4] sm:$0xf]
      %v292 = vld [vmem:[%s1 + $0xb8] sm:$0xf]
      %v293 = vld [vmem:[%s1 + $0xbc] sm:$0xf]
      %v294 = vld [vmem:[%s1 + $0xc0] sm:$0xf]
      %v295 = vld [vmem:[%s1 + $0xc4] sm:$0xf]
      %v296 = vld [vmem:[%s1 + $0xc8] sm:$0xf]
      %v297 = vld [vmem:[%s1 + $0xcc] sm:$0xf]
      %v298 = vld [vmem:[%s1 + $0xd0] sm:$0xf]
      %v299 = vld [vmem:[%s1 + $0xd4] sm:$0xf]
      %v300 = vld [vmem:[%s2] sm:$0x1]
      %v302 = vlaneseq
      %v303 = vshrl.u32 %v302, 7
      %v304 = vsub.s32 0, %v303
      %v305 = vrot.slane %v300, %v304
      %v339 = vunpack.c.l.b16 %v214
      %v340 = vunpack.c.h.b16 %v214
      %v341 = vunpack.c.l.b16 %v215
      %v342 = vunpack.c.h.b16 %v215
      %v343 = vunpack.c.l.b16 %v216
      %v344 = vunpack.c.h.b16 %v216
      %v345 = vunpack.c.l.b16 %v217
      %v346 = vunpack.c.h.b16 %v217
      %v347 = vunpack.c.l.b16 %v218
      %v348 = vunpack.c.h.b16 %v218
      %v349 = vunpack.c.l.b16 %v219
      %v350 = vunpack.c.h.b16 %v219
      %v351 = vunpack.c.l.b16 %v220
      %v352 = vunpack.c.h.b16 %v220
      %v353 = vunpack.c.l.b16 %v221
      %v354 = vunpack.c.h.b16 %v221
      %v355 = vunpack.c.l.b16 %v222
      %v356 = vunpack.c.h.b16 %v222
      %v357 = vunpack.c.l.b16 %v223
      %v358 = vunpack.c.h.b16 %v223
      %v359 = vunpack.c.l.b16 %v224
      %v360 = vunpack.c.h.b16 %v224
      %v361 = vunpack.c.l.b16 %v225
      %v362 = vunpack.c.h.b16 %v225
      %v363 = vunpack.c.l.b16 %v226
      %v364 = vunpack.c.h.b16 %v226
      %v365 = vunpack.c.l.b16 %v227
      %v366 = vunpack.c.h.b16 %v227
      %v367 = vunpack.c.l.b16 %v228
      %v368 = vunpack.c.h.b16 %v228
      %v369 = vunpack.c.l.b16 %v229
      %v370 = vunpack.c.h.b16 %v229
      %v371 = vunpack.c.l.b16 %v230
      %v372 = vunpack.c.h.b16 %v230
      %v373 = vunpack.c.l.b16 %v231
      %v374 = vunpack.c.h.b16 %v231
      %v375 = vunpack.c.l.b16 %v232
      %v376 = vunpack.c.h.b16 %v232
      %v377 = vunpack.c.l.b16 %v233
      %v378 = vunpack.c.h.b16 %v233
      %v379 = vunpack.c.l.b16 %v234
      %v380 = vunpack.c.h.b16 %v234
      %v381 = vunpack.c.l.b16 %v235
      %v382 = vunpack.c.h.b16 %v235
      %v383 = vunpack.c.l.b16 %v236
      %v384 = vunpack.c.h.b16 %v236
      %v385 = vunpack.c.l.b16 %v237
      %v386 = vunpack.c.h.b16 %v237
      %v387 = vunpack.c.l.b16 %v238
      %v388 = vunpack.c.h.b16 %v238
      %v389 = vunpack.c.l.b16 %v239
      %v390 = vunpack.c.h.b16 %v239
      %v391 = vunpack.c.l.b16 %v240
      %v392 = vunpack.c.h.b16 %v240
      %v393 = vunpack.c.l.b16 %v241
      %v394 = vunpack.c.h.b16 %v241
      %v395 = vunpack.c.l.b16 %v242
      %v396 = vunpack.c.h.b16 %v242
      %v397 = vunpack.c.l.b16 %v243
      %v398 = vunpack.c.h.b16 %v243
      %v399 = vunpack.c.l.b16 %v244
      %v400 = vunpack.c.h.b16 %v244
      %v401 = vunpack.c.l.b16 %v245
      %v402 = vunpack.c.h.b16 %v245
      %v403 = vpack.c.b16 %v343, %v339
      %v404 = vpack.c.b16 %v344, %v340
      %v405 = vpack.c.b16 %v345, %v341
      %v406 = vpack.c.b16 %v346, %v342
      %v407 = vpack.c.b16 %v351, %v347
      %v408 = vpack.c.b16 %v352, %v348
      %v409 = vpack.c.b16 %v353, %v349
      %v410 = vpack.c.b16 %v354, %v350
      %v411 = vpack.c.b16 %v359, %v355
      %v412 = vpack.c.b16 %v360, %v356
      %v413 = vpack.c.b16 %v361, %v357
      %v414 = vpack.c.b16 %v362, %v358
      %v415 = vpack.c.b16 %v367, %v363
      %v416 = vpack.c.b16 %v368, %v364
      %v417 = vpack.c.b16 %v369, %v365
      %v418 = vpack.c.b16 %v370, %v366
      %v419 = vpack.c.b16 %v375, %v371
      %v420 = vpack.c.b16 %v376, %v372
      %v421 = vpack.c.b16 %v377, %v373
      %v422 = vpack.c.b16 %v378, %v374
      %v423 = vpack.c.b16 %v383, %v379
      %v424 = vpack.c.b16 %v384, %v380
      %v425 = vpack.c.b16 %v385, %v381
      %v426 = vpack.c.b16 %v386, %v382
      %v427 = vpack.c.b16 %v391, %v387
      %v428 = vpack.c.b16 %v392, %v388
      %v429 = vpack.c.b16 %v393, %v389
      %v430 = vpack.c.b16 %v394, %v390
      %v431 = vpack.c.b16 %v399, %v395
      %v432 = vpack.c.b16 %v400, %v396
      %v433 = vpack.c.b16 %v401, %v397
      %v434 = vpack.c.b16 %v402, %v398
      %v513 = vunpack.c.l.b16 %v246
      %v514 = vunpack.c.l.b16 %v247
      %v515 = vunpack.c.l.b16 %v248
      %v516 = vunpack.c.l.b16 %v249
      %v517 = vunpack.c.l.b16 %v250
      %v518 = vunpack.c.l.b16 %v251
      %v519 = vunpack.c.l.b16 %v252
      %v520 = vunpack.c.l.b16 %v253
      %v521 = vunpack.c.l.b16 %v254
      %v522 = vunpack.c.l.b16 %v255
      %v523 = vunpack.c.l.b16 %v256
      %v524 = vunpack.c.l.b16 %v257
      %v525 = vunpack.c.l.b16 %v258
      %v526 = vunpack.c.l.b16 %v259
      %v527 = vunpack.c.l.b16 %v260
      %v528 = vunpack.c.l.b16 %v261
      %v529 = vunpack.c.l.b16 %v262
      %v530 = vunpack.c.l.b16 %v263
      %v531 = vunpack.c.l.b16 %v264
      %v532 = vunpack.c.l.b16 %v265
      %v533 = vunpack.c.l.b16 %v266
      %v534 = vunpack.c.l.b16 %v267
      %v535 = vunpack.c.l.b16 %v268
      %v536 = vunpack.c.l.b16 %v269
      %v537 = vunpack.c.l.b16 %v270
      %v538 = vunpack.c.l.b16 %v271
      %v539 = vunpack.c.l.b16 %v272
      %v540 = vunpack.c.l.b16 %v273
      %v541 = vunpack.c.l.b16 %v274
      %v542 = vunpack.c.l.b16 %v275
      %v543 = vunpack.c.l.b16 %v276
      %v544 = vunpack.c.l.b16 %v277
      %v545 = vunpack.c.l.b16 %v278
      %v546 = vunpack.c.l.b16 %v279
      %v547 = vunpack.c.l.b16 %v280
      %v548 = vunpack.c.l.b16 %v281
      %v549 = vunpack.c.l.b16 %v282
      %v550 = vunpack.c.l.b16 %v283
      %v551 = vunpack.c.l.b16 %v284
      %v552 = vunpack.c.l.b16 %v285
      %v553 = vunpack.c.l.b16 %v286
      %v554 = vunpack.c.l.b16 %v287
      %v555 = vunpack.c.l.b16 %v288
      %v556 = vunpack.c.l.b16 %v289
      %v557 = vunpack.c.l.b16 %v290
      %v558 = vunpack.c.l.b16 %v291
      %v559 = vunpack.c.l.b16 %v292
      %v560 = vunpack.c.l.b16 %v293
      %v561 = vunpack.c.l.b16 %v294
      %v562 = vunpack.c.l.b16 %v295
      %v563 = vunpack.c.l.b16 %v296
      %v564 = vunpack.c.l.b16 %v297
      %v565 = vunpack.c.l.b16 %v298
      %v566 = vunpack.c.l.b16 %v299
      %v567 = vpack.c.b16 %v514, %v513
      %v568 = vpack.c.b16 %v516, %v515
      %v569 = vpack.c.b16 %v518, %v517
      %v570 = vpack.c.b16 %v520, %v519
      %v571 = vpack.c.b16 %v522, %v521
      %v572 = vpack.c.b16 %v524, %v523
      %v573 = vpack.c.b16 %v526, %v525
      %v574 = vpack.c.b16 %v528, %v527
      %v575 = vpack.c.b16 %v530, %v529
      %v576 = vpack.c.b16 %v532, %v531
      %v577 = vpack.c.b16 %v534, %v533
      %v578 = vpack.c.b16 %v536, %v535
      %v579 = vpack.c.b16 %v538, %v537
      %v580 = vpack.c.b16 %v540, %v539
      %v581 = vpack.c.b16 %v542, %v541
      %v582 = vpack.c.b16 %v544, %v543
      %v583 = vpack.c.b16 %v546, %v545
      %v584 = vpack.c.b16 %v548, %v547
      %v585 = vpack.c.b16 %v550, %v549
      %v586 = vpack.c.b16 %v552, %v551
      %v587 = vpack.c.b16 %v554, %v553
      %v588 = vpack.c.b16 %v556, %v555
      %v589 = vpack.c.b16 %v558, %v557
      %v590 = vpack.c.b16 %v560, %v559
      %v591 = vpack.c.b16 %v562, %v561
      %v592 = vpack.c.b16 %v564, %v563
      %v593 = vpack.c.b16 %v566, %v565
      %vm621 = vcmask 392192
      %v623 = vsel %vm621, %v406, 0
      %v626 = vsel %vm621, %v410, 0
      %v629 = vsel %vm621, %v414, 0
      %v632 = vsel %vm621, %v418, 0
      %v635 = vsel %vm621, %v422, 0
      %v638 = vsel %vm621, %v426, 0
      %v641 = vsel %vm621, %v430, 0
      %v644 = vsel %vm621, %v434, 0
      %646 = vmatprep.subr.bf16.mxu0 0
      %647 = vmatpush1.bf16.msra.mxu0 %v574
      %648 = vmatprep.subr.bf16.mxu0 0
      %649 = vmatpush1.bf16.msra.mxu0 %v573
      %650 = vmatprep.subr.bf16.mxu0 0
      %651 = vmatpush1.bf16.msra.mxu0 %v572
      %652 = vmatprep.subr.bf16.mxu0 0
      %653 = vmatpush1.bf16.msra.mxu0 %v571
      %654 = vmatprep.subr.bf16.mxu0 0
      %655 = vmatpush1.bf16.msra.mxu0 %v570
      %656 = vmatprep.subr.bf16.mxu0 0
      %657 = vmatpush1.bf16.msra.mxu0 %v569
      %658 = vmatprep.subr.bf16.mxu0 0
      %659 = vmatpush1.bf16.msra.mxu0 %v568
      %660 = vmatprep.subr.bf16.mxu0 0
      %661 = vmatpush1.bf16.msra.mxu0 %v567
      %662 = vmatprep.subr.bf16.mxu0 0
      %663 = vmatpush2.bf16.msra.mxu0 %v582
      %664 = vmatprep.subr.bf16.mxu0 0
      %665 = vmatpush2.bf16.msra.mxu0 %v581
      %666 = vmatprep.subr.bf16.mxu0 0
      %667 = vmatpush2.bf16.msra.mxu0 %v580
      %668 = vmatprep.subr.bf16.mxu0 0
      %669 = vmatpush2.bf16.msra.mxu0 %v579
      %670 = vmatprep.subr.bf16.mxu0 0
      %671 = vmatpush2.bf16.msra.mxu0 %v578
      %672 = vmatprep.subr.bf16.mxu0 0
      %673 = vmatpush2.bf16.msra.mxu0 %v577
      %674 = vmatprep.subr.bf16.mxu0 0
      %675 = vmatpush2.bf16.msra.mxu0 %v576
      %676 = vmatprep.subr.bf16.mxu0 0
      %677 = vmatpush2.bf16.msra.mxu0 %v575
      %678 = vmatprep.mubr.bf16.mxu0 %v404
      %679 = vmatmul.mubr.bf16.gmra.mxu0 %v403
      %v680 = vpop.f32.mrf.mxu0
      %v681 = vadd.f32 %v305, %v680
      %v682 = vpop.f32.mrf.mxu0
      %v683 = vpop.f32.mrf.mxu0
      %v684 = vadd.f32 %v305, %v683
      %v685 = vpop.f32.mrf.mxu0
      %686 = vmatprep.mubr.bf16.mxu0 %v408
      %687 = vmatmul.mubr.bf16.gmra.mxu0 %v407
      %v688 = vpop.f32.mrf.mxu0
      %v689 = vadd.f32 %v305, %v688
      %v690 = vpop.f32.mrf.mxu0
      %v691 = vpop.f32.mrf.mxu0
      %v692 = vadd.f32 %v305, %v691
      %v693 = vpop.f32.mrf.mxu0
      %694 = vmatprep.mubr.bf16.mxu0 %v412
      %695 = vmatmul.mubr.bf16.gmra.mxu0 %v411
      %v696 = vpop.f32.mrf.mxu0
      %v697 = vadd.f32 %v305, %v696
      %v698 = vpop.f32.mrf.mxu0
      %v699 = vpop.f32.mrf.mxu0
      %v700 = vadd.f32 %v305, %v699
      %v701 = vpop.f32.mrf.mxu0
      %702 = vmatprep.mubr.bf16.mxu0 %v416
      %703 = vmatmul.mubr.bf16.gmra.mxu0 %v415
      %v704 = vpop.f32.mrf.mxu0
      %v705 = vadd.f32 %v305, %v704
      %v706 = vpop.f32.mrf.mxu0
      %v707 = vpop.f32.mrf.mxu0
      %v708 = vadd.f32 %v305, %v707
      %v709 = vpop.f32.mrf.mxu0
      %710 = vmatprep.mubr.bf16.mxu0 %v420
      %711 = vmatmul.mubr.bf16.gmra.mxu0 %v419
      %v712 = vpop.f32.mrf.mxu0
      %v713 = vadd.f32 %v305, %v712
      %v714 = vpop.f32.mrf.mxu0
      %v715 = vpop.f32.mrf.mxu0
      %v716 = vadd.f32 %v305, %v715
      %v717 = vpop.f32.mrf.mxu0
      %718 = vmatprep.mubr.bf16.mxu0 %v424
      %719 = vmatmul.mubr.bf16.gmra.mxu0 %v423
      %v720 = vpop.f32.mrf.mxu0
      %v721 = vadd.f32 %v305, %v720
      %v722 = vpop.f32.mrf.mxu0
      %v723 = vpop.f32.mrf.mxu0
      %v724 = vadd.f32 %v305, %v723
      %v725 = vpop.f32.mrf.mxu0
      %726 = vmatprep.mubr.bf16.mxu0 %v428
      %727 = vmatmul.mubr.bf16.gmra.mxu0 %v427
      %v728 = vpop.f32.mrf.mxu0
      %v729 = vadd.f32 %v305, %v728
      %v730 = vpop.f32.mrf.mxu0
      %v731 = vpop.f32.mrf.mxu0
      %v732 = vadd.f32 %v305, %v731
      %v733 = vpop.f32.mrf.mxu0
      %734 = vmatprep.mubr.bf16.mxu0 %v432
      %735 = vmatmul.mubr.bf16.gmra.mxu0 %v431
      %v736 = vpop.f32.mrf.mxu0
      %v737 = vadd.f32 %v305, %v736
      %v738 = vpop.f32.mrf.mxu0
      %v739 = vpop.f32.mrf.mxu0
      %v740 = vadd.f32 %v305, %v739
      %v741 = vpop.f32.mrf.mxu0
      %742 = vdwg.mxu0
      %743 = vmatprep.subr.bf16.mxu0 0
      %744 = vmatpush1.bf16.msra.mxu0 %v590
      %745 = vmatprep.subr.bf16.mxu0 0
      %746 = vmatpush1.bf16.msra.mxu0 %v589
      %747 = vmatprep.subr.bf16.mxu0 0
      %748 = vmatpush1.bf16.msra.mxu0 %v588
      %749 = vmatprep.subr.bf16.mxu0 0
      %750 = vmatpush1.bf16.msra.mxu0 %v587
      %751 = vmatprep.subr.bf16.mxu0 0
      %752 = vmatpush1.bf16.msra.mxu0 %v586
      %753 = vmatprep.subr.bf16.mxu0 0
      %754 = vmatpush1.bf16.msra.mxu0 %v585
      %755 = vmatprep.subr.bf16.mxu0 0
      %756 = vmatpush1.bf16.msra.mxu0 %v584
      %757 = vmatprep.subr.bf16.mxu0 0
      %758 = vmatpush1.bf16.msra.mxu0 %v583
      %759 = vmatprep.subr.bf16.mxu0 0
      %760 = vmatpush2.bf16.msra.mxu0 0
      %761 = vmatprep.subr.bf16.mxu0 0
      %762 = vmatpush2.bf16.msra.mxu0 0
      %763 = vmatprep.subr.bf16.mxu0 0
      %764 = vmatpush2.bf16.msra.mxu0 0
      %765 = vmatprep.subr.bf16.mxu0 0
      %766 = vmatpush2.bf16.msra.mxu0 0
      %767 = vmatprep.subr.bf16.mxu0 0
      %768 = vmatpush2.bf16.msra.mxu0 0
      %769 = vmatprep.subr.bf16.mxu0 0
      %770 = vmatpush2.bf16.msra.mxu0 %v593
      %771 = vmatprep.subr.bf16.mxu0 0
      %772 = vmatpush2.bf16.msra.mxu0 %v592
      %773 = vmatprep.subr.bf16.mxu0 0
      %774 = vmatpush2.bf16.msra.mxu0 %v591
      %775 = vmatprep.mubr.bf16.mxu0 %v623
      %776 = vmatmul.mubr.bf16.gmra.mxu0 %v405
      %v777 = vpop.f32.mrf.mxu0
      %v778 = vadd.f32 %v681, %v777
      %v779 = vpop.f32.mrf.mxu0
      %v780 = vpop.f32.mrf.mxu0
      %v781 = vadd.f32 %v684, %v780
      %v782 = vpop.f32.mrf.mxu0
      %783 = vmatprep.mubr.bf16.mxu0 %v626
      %784 = vmatmul.mubr.bf16.gmra.mxu0 %v409
      %v785 = vpop.f32.mrf.mxu0
      %v786 = vadd.f32 %v689, %v785
      %v787 = vpop.f32.mrf.mxu0
      %v788 = vpop.f32.mrf.mxu0
      %v789 = vadd.f32 %v692, %v788
      %v790 = vpop.f32.mrf.mxu0
      %791 = vmatprep.mubr.bf16.mxu0 %v629
      %792 = vmatmul.mubr.bf16.gmra.mxu0 %v413
      %v793 = vpop.f32.mrf.mxu0
      %v794 = vadd.f32 %v697, %v793
      %v795 = vpop.f32.mrf.mxu0
      %v796 = vpop.f32.mrf.mxu0
      %v797 = vadd.f32 %v700, %v796
      %v798 = vpop.f32.mrf.mxu0
      %799 = vmatprep.mubr.bf16.mxu0 %v632
      %800 = vmatmul.mubr.bf16.gmra.mxu0 %v417
      %v801 = vpop.f32.mrf.mxu0
      %v802 = vadd.f32 %v705, %v801
      %v803 = vpop.f32.mrf.mxu0
      %v804 = vpop.f32.mrf.mxu0
      %v805 = vadd.f32 %v708, %v804
      %v806 = vpop.f32.mrf.mxu0
      %807 = vmatprep.mubr.bf16.mxu0 %v635
      %808 = vmatmul.mubr.bf16.gmra.mxu0 %v421
      %v809 = vpop.f32.mrf.mxu0
      %v810 = vadd.f32 %v713, %v809
      %v811 = vpop.f32.mrf.mxu0
      %v812 = vpop.f32.mrf.mxu0
      %v813 = vadd.f32 %v716, %v812
      %v814 = vpop.f32.mrf.mxu0
      %815 = vmatprep.mubr.bf16.mxu0 %v638
      %816 = vmatmul.mubr.bf16.gmra.mxu0 %v425
      %v817 = vpop.f32.mrf.mxu0
      %v818 = vadd.f32 %v721, %v817
      %v819 = vpop.f32.mrf.mxu0
      %v820 = vpop.f32.mrf.mxu0
      %v821 = vadd.f32 %v724, %v820
      %v822 = vpop.f32.mrf.mxu0
      %823 = vmatprep.mubr.bf16.mxu0 %v641
      %824 = vmatmul.mubr.bf16.gmra.mxu0 %v429
      %v825 = vpop.f32.mrf.mxu0
      %v826 = vadd.f32 %v729, %v825
      %v827 = vpop.f32.mrf.mxu0
      %v828 = vpop.f32.mrf.mxu0
      %v829 = vadd.f32 %v732, %v828
      %v830 = vpop.f32.mrf.mxu0
      %831 = vmatprep.mubr.bf16.mxu0 %v644
      %832 = vmatmul.mubr.bf16.gmra.mxu0 %v433
      %v833 = vpop.f32.mrf.mxu0
      %v834 = vadd.f32 %v737, %v833
      %v835 = vpop.f32.mrf.mxu0
      %v836 = vpop.f32.mrf.mxu0
      %v837 = vadd.f32 %v740, %v836
      %v838 = vpop.f32.mrf.mxu0
      %839 = vdwg.mxu0
      %v840 = vmax.f32 %v778, 0.0
      %v841 = vmax.f32 %v781, 0.0
      %v842 = vmax.f32 %v786, 0.0
      %v843 = vmax.f32 %v789, 0.0
      %v844 = vmax.f32 %v794, 0.0
      %v845 = vmax.f32 %v797, 0.0
      %v846 = vmax.f32 %v802, 0.0
      %v847 = vmax.f32 %v805, 0.0
      %v848 = vmax.f32 %v810, 0.0
      %v849 = vmax.f32 %v813, 0.0
      %v850 = vmax.f32 %v818, 0.0
      %v851 = vmax.f32 %v821, 0.0
      %v852 = vmax.f32 %v826, 0.0
      %v853 = vmax.f32 %v829, 0.0
      %v854 = vmax.f32 %v834, 0.0
      %v855 = vmax.f32 %v837, 0.0
      %v856 = vpack.c.bf16 %v841, %v840
      %v857 = vpack.c.bf16 %v843, %v842
      %v858 = vpack.c.bf16 %v845, %v844
      %v859 = vpack.c.bf16 %v847, %v846
      %v860 = vpack.c.bf16 %v849, %v848
      %v861 = vpack.c.bf16 %v851, %v850
      %v862 = vpack.c.bf16 %v853, %v852
      %v863 = vpack.c.bf16 %v855, %v854
      %v872 = vunpack.c.l.b16 %v856
      %v873 = vunpack.c.h.b16 %v856
      %v874 = vunpack.c.l.b16 %v857
      %v875 = vunpack.c.h.b16 %v857
      %v876 = vunpack.c.l.b16 %v858
      %v877 = vunpack.c.h.b16 %v858
      %v878 = vunpack.c.l.b16 %v859
      %v879 = vunpack.c.h.b16 %v859
      %v880 = vunpack.c.l.b16 %v860
      %v881 = vunpack.c.h.b16 %v860
      %v882 = vunpack.c.l.b16 %v861
      %v883 = vunpack.c.h.b16 %v861
      %v884 = vunpack.c.l.b16 %v862
      %v885 = vunpack.c.h.b16 %v862
      %v886 = vunpack.c.l.b16 %v863
      %v887 = vunpack.c.h.b16 %v863
      %v888 = vpack.c.b16 %v872, %v872
      %v889 = vpack.c.b16 %v873, %v873
      %v890 = vpack.c.b16 %v874, %v874
      %v891 = vpack.c.b16 %v875, %v875
      %v892 = vpack.c.b16 %v876, %v876
      %v893 = vpack.c.b16 %v877, %v877
      %v894 = vpack.c.b16 %v878, %v878
      %v895 = vpack.c.b16 %v879, %v879
      %v896 = vpack.c.b16 %v880, %v880
      %v897 = vpack.c.b16 %v881, %v881
      %v898 = vpack.c.b16 %v882, %v882
      %v899 = vpack.c.b16 %v883, %v883
      %v900 = vpack.c.b16 %v884, %v884
      %v901 = vpack.c.b16 %v885, %v885
      %v902 = vpack.c.b16 %v886, %v886
      %v903 = vpack.c.b16 %v887, %v887
      %920 = vst [vmem:[%s211] sm:$0xf] %v888
      %921 = vst [vmem:[%s211 + $0x4] sm:$0xf] %v889
      %922 = vst [vmem:[%s211 + $0x8] sm:$0xf] %v890
      %923 = vst [vmem:[%s211 + $0xc] sm:$0xf] %v891
      %924 = vst [vmem:[%s211 + $0x10] sm:$0xf] %v892
      %925 = vst [vmem:[%s211 + $0x14] sm:$0xf] %v893
      %926 = vst [vmem:[%s211 + $0x18] sm:$0xf] %v894
      %927 = vst [vmem:[%s211 + $0x1c] sm:$0xf] %v895
      %928 = vst [vmem:[%s211 + $0x20] sm:$0xf] %v896
      %929 = vst [vmem:[%s211 + $0x24] sm:$0xf] %v897
      %930 = vst [vmem:[%s211 + $0x28] sm:$0xf] %v898
      %931 = vst [vmem:[%s211 + $0x2c] sm:$0xf] %v899
      %932 = vst [vmem:[%s211 + $0x30] sm:$0xf] %v900
      %933 = vst [vmem:[%s211 + $0x34] sm:$0xf] %v901
      %934 = vst [vmem:[%s211 + $0x38] sm:$0xf] %v902
      %935 = vst [vmem:[%s211 + $0x3c] sm:$0xf] %v903
      %s936 = smul.u32 16, %s19
      %p937 = scmp.lt.s32.totalorder %s18, 1
      %s938 = scalar_select %p937, %s18, 1
      %p939 = scmp.lt.s32.totalorder %s936, 15
      %s940 = scalar_select %p939, %s936, 15
      %s941 = smul.addr %s938, 16
      %s942 = sadd.s32 %s940, %s941
      %s943 = smul.addr %s942, 4
      %s944 = scalar_lea.vmem %s3, %s943
      // Predicated region
      $region33: #{_lambda_.1} parent=31 // pred_check
        %p945 = pneg %p116
      $region34: #{_lambda_.1} parent=31 // pred_check_branch
        %947 = sbr.rel (%p945) target = $region36
      $region35: #{_lambda_.1} parent=31 // pred_region
        %s948 = smul.u32 16, %s19
      $region36: #{_lambda_.1} parent=31 // pred_fallthru
        _
    $region32: #{_lambda_.1} parent=5 // pred_fallthru
      _
    %p949 = scmp.le.s32.totalorder 2, %s9
    // Predicated region
    $region37: #{_lambda_.1} parent=5 // pred_check
      %p950 = pneg %p949
    $region38: #{_lambda_.1} parent=5 // pred_check_branch
      %952 = sbr.rel (%p950) target = $region40
    $region39: #{_lambda_.1} parent=5 // pred_region
      %s953 = ssub.s32 %s9, 2
      // Predicated region
      $region41: #{_lambda_.1} parent=39 // pred_check
        %p954 = pneg %p122
      $region42: #{_lambda_.1} parent=39 // pred_check_branch
        %956 = sbr.rel (%p954) target = $region44
      $region43: #{_lambda_.1} parent=39 // pred_region
        %s957 = smul.u32 16, %s21
        %p958 = scmp.lt.s32.totalorder %s20, 1
        %s959 = scalar_select %p958, %s20, 1
        %p960 = scmp.lt.s32.totalorder %s957, 15
        %s961 = scalar_select %p960, %s957, 15
        %s962 = smul.addr %s959, 16
        %s963 = sadd.s32 %s961, %s962
        %s964 = smul.addr %s963, 4
        %s965 = scalar_lea.vmem %s3, %s964
      $region44: #{_lambda_.1} parent=39 // pred_fallthru
        _
    $region40: #{_lambda_.1} parent=5 // pred_fallthru
      _
  $region6: #{_lambda_.1} parent=0 // loop_footer
    %s13 = sadd.s32 1, %s9
  $region7: #{_lambda_.1} parent=0 // loop_footer_branch
    %8 = sbr.rel target = $region3
  $region8: #{_lambda_.1} parent=0 // loop_exit
    _

</llo_original>
